<compile_context>
chip_gen: v5e
topology: v5e:2x2
jax: 0.10.0
libtpu: 0.0.40
codegen_flags: <defaults>
</compile_context>

<pallas_src>
import functools
import math

import numpy as np
import jax
import jax.numpy as jnp
from jax.experimental import pallas as pl
from jax.experimental.pallas import tpu as pltpu


def _round_up(x, m):
    return ((x + m - 1) // m) * m


def _rotary_freqs_kernel(t_ref, fsel_ref, out_ref, *, k, use_mxu):
    # t_ref   : (tile_r, k)    f32 -- k original position rows packed per output row
    # fsel_ref: (k, k*D)       f32 -- fsel[q, q*D:(q+1)*D] = repeat_interleave(freqs, 2), else 0
    # out_ref : (tile_r, k*D)  f32 -- lane-dense packed frequency table
    t = t_ref[...]
    fsel = fsel_ref[...]
    if use_mxu and k > 1:
        # v7x: ride the otherwise-idle MXU for the degenerate K=k contraction; keeps the
        # kernel HBM-write-bound instead of VALU-bound at D=32.  HIGHEST precision keeps
        # f32 accuracy for the table.
        out_ref[...] = jnp.dot(t, fsel, preferred_element_type=jnp.float32,
                               precision=jax.lax.Precision.HIGHEST)
    else:
        # v5e/v6e: k (<=8) VPU broadcast-multiply/accumulate steps, exact f32 (+0 adds),
        # one full-width unmasked store per output vreg.
        acc = t[:, 0:1] * fsel[0:1, :]
        for q in range(1, k):
            acc = acc + t[:, q:q + 1] * fsel[q:q + 1, :]
        out_ref[...] = acc


class NpuRotaryEmbedding:
    """JAX/Pallas port of mindspeed_mm NpuRotaryEmbedding (forward only)."""

    # ~4 MiB of (input + output) per pipeline block; double-buffered footprint ~8 MiB,
    # comfortably inside the default scoped VMEM on v5e (16 MiB) / v6e / v7x (32 MiB).
    _TARGET_BLOCK_BYTES = 4 << 20
    _MAX_PACK_K = 8

    def __init__(self, dim, custom_freqs=None, freqs_for="lang", theta=10000,
                 max_freq=10, num_freqs=1, learned_freq=False, use_xpos=False,
                 xpos_scale_base=512, interpolate_factor=1.0,
                 theta_rescale_factor=1.0, seq_before_head_dim=False,
                 cache_if_possible=True):
        theta = float(theta) * theta_rescale_factor ** (dim / (dim - 2))
        self.freqs_for = freqs_for
        if custom_freqs is not None:
            freqs = np.asarray(custom_freqs, dtype=np.float32)
        elif freqs_for == "lang":
            freqs = 1.0 / (theta ** (np.arange(0, dim, 2)[: dim // 2]
                                     .astype(np.float32) / dim))
        elif freqs_for == "pixel":
            freqs = np.linspace(1.0, max_freq / 2, dim // 2,
                                dtype=np.float32) * math.pi
        elif freqs_for == "constant":
            freqs = np.ones((num_freqs,), dtype=np.float32)
        else:
            raise ValueError(f"unknown freqs_for: {freqs_for}")
        self.freqs = jnp.asarray(freqs, dtype=jnp.float32)   # nn.Parameter equivalent
        self.learned_freq = learned_freq
        self.use_xpos = use_xpos
        self.xpos_scale_base = xpos_scale_base
        self.seq_before_head_dim = seq_before_head_dim
        self.default_seq_dim = -3 if seq_before_head_dim else -2
        self.cache_if_possible = cache_if_possible
        self._cached_freqs = None
        if interpolate_factor < 1.0:
            raise Exception("interpolate_factor must less than 1.")
        self.interpolate_factor = interpolate_factor

        # ---- hoisted kernel constants (depend only on dim/freqs) ----
        D = 2 * int(self.freqs.shape[0])          # output width (= 2*(dim//2) for 'lang')
        self._D = D
        # Lane-packing factor: pack k position rows per stored row so the store width is a
        # multiple of 128 lanes whenever lcm(D,128)/D is small enough.
        if D % 128 == 0:
            k = 1
        else:
            k = 128 // math.gcd(D, 128)           # = lcm(D, 128) // D
            if k > self._MAX_PACK_K:
                k = 1                              # TODO(synk): very awkward D -> masked stores
        self._pack_k = k
        # Masked selector: fsel[q, q*D + d] = repeat_interleave(freqs, 2)[d], else 0.
        freq_full = jnp.repeat(self.freqs, 2)                       # (D,) interleaved repeat
        eye = jnp.eye(k, dtype=freq_full.dtype)                     # (k, k)
        self._fsel = (eye[:, :, None] * freq_full[None, None, :]).reshape(k, k * D)

        # v7x (2 TC, MRB, 3.2 TB/s HBM): offload the k-row contraction to the MXU.
        try:
            kind = jax.devices()[0].device_kind.lower()
        except Exception:
            kind = ""
        self._use_mxu = (("v7" in kind) or ("tpu7" in kind)) and (k > 1)

    def get_seq_pos(self, seq_len, offset=0, dtype=jnp.float32):
        return (jnp.arange(seq_len, dtype=dtype) + offset) / self.interpolate_factor

    def _compute_table(self, t):
        """Pallas kernel wrapper: t of any shape -> t.shape + (D,) rotary table."""
        t = jnp.asarray(t, dtype=self.freqs.dtype)
        orig_shape = t.shape
        S = int(np.prod(orig_shape)) if len(orig_shape) > 0 else 1
        D = self._D
        if S == 0:
            return jnp.zeros(tuple(orig_shape) + (D,), dtype=jnp.float32)

        k = self._pack_k
        kD = k * D
        t_flat = t.reshape(S)

        R_needed = -(-S // k)                      # ceil(S / k) packed rows

        # Byte-budgeted tile: output row (kD lanes, >=128 in VMEM) + lane-padded input row.
        per_row_bytes = 4 * (max(kD, 128) + 128)
        tile_r = max(8, (self._TARGET_BLOCK_BYTES // per_row_bytes) // 8 * 8)
        # Keep >=2 grid steps when there is enough work (v7x megacore sharding).
        if R_needed > 8:
            tile_r = min(tile_r, _round_up(-(-R_needed // 2), 8))
        tile_r = min(tile_r, _round_up(R_needed, 8))
        R_pad = _round_up(R_needed, tile_r)
        S_pad = R_pad * k

        t_pad = jnp.pad(t_flat, (0, S_pad - S))    # zero rows -> zero freqs, trimmed later
        t2 = t_pad.reshape(R_pad, k)

        grid = (R_pad // tile_r,)
        cost = pl.CostEstimate(
            flops=2 * S_pad * D,
            transcendentals=0,
            bytes_accessed=4 * (S_pad * D + S_pad + k * kD))

        out = pl.pallas_call(
            functools.partial(_rotary_freqs_kernel, k=k, use_mxu=self._use_mxu),
            out_shape=jax.ShapeDtypeStruct((R_pad, kD), jnp.float32),
            grid_spec=pltpu.PrefetchScalarGridSpec(
                num_scalar_prefetch=0,
                grid=grid,
                in_specs=[
                    pl.BlockSpec((tile_r, k), lambda i: (i, 0)),
                    pl.BlockSpec((k, kD), lambda i: (0, 0)),   # constant index: fetched once
                ],
                # Full-width output block: contiguous HBM writeback, unmasked 128-lane stores.
                out_specs=pl.BlockSpec((tile_r, kD), lambda i: (i, 0)),
            ),
            compiler_params=pltpu.CompilerParams(
                dimension_semantics=("parallel",)),
            cost_estimate=cost,
        )(t2, self._fsel)

        # Row-major reshape back: (R_pad, k*D) -> (S_pad, D) is bit-identical, then trim pad.
        return out.reshape(S_pad, D)[:S].reshape(tuple(orig_shape) + (D,))

    def forward(self, t, seq_len=None, offset=0):
        should_cache = (self.cache_if_possible and (not self.learned_freq)
                        and seq_len is not None and self.freqs_for != "pixel")
        if (should_cache and self._cached_freqs is not None
                and offset + seq_len <= self._cached_freqs.shape[0]):
            return self._cached_freqs[offset:offset + seq_len]

        freqs_out = self._compute_table(t)

        if should_cache and freqs_out.ndim == 2 and freqs_out.shape[0] == seq_len:
            self._cached_freqs = freqs_out
        return freqs_out

    __call__ = forward


def npu_rotary_forward_ref(freqs_half, t):
    """Pure numpy reference mirroring the torch forward: einsum + interleaved repeat."""
    freqs_half = np.asarray(freqs_half, dtype=np.float64)
    t = np.asarray(t, dtype=np.float64)
    f = t[..., None] * freqs_half                 # einsum('..., f -> ... f')
    return np.repeat(f, 2, axis=-1)               # repeat '... n -> ... (n r)', r=2


if __name__ == "__main__":
    key = jax.random.PRNGKey(0)
    k1, k2 = jax.random.split(key)

    # Case 1: dim=32 (D=32 -> lane-packing k=4), 2-D position tensor (batch of sequences).
    rope32 = NpuRotaryEmbedding(dim=32, freqs_for="lang", theta=10000)
    t1 = jax.random.uniform(k1, (2, 48), dtype=jnp.float32, maxval=64.0)
    out1 = jax.block_until_ready(rope32(t1))
    ref1 = npu_rotary_forward_ref(np.asarray(rope32.freqs), np.asarray(t1))
    np.testing.assert_allclose(np.asarray(out1), ref1, rtol=1e-5, atol=1e-5)
    assert out1.shape == (2, 48, 32)

    # Case 2: dim=64 (D=64 -> k=2), standard get_seq_pos positions, length not a tile multiple.
    rope64 = NpuRotaryEmbedding(dim=64, freqs_for="lang", theta=10000)
    t2 = rope64.get_seq_pos(100, offset=3)
    out2 = jax.block_until_ready(rope64(t2, seq_len=100, offset=3))
    ref2 = npu_rotary_forward_ref(np.asarray(rope64.freqs), np.asarray(t2))
    np.testing.assert_allclose(np.asarray(out2), ref2, rtol=1e-5, atol=1e-5)
    assert out2.shape == (100, 64)
    # cached_freqs path (should_cache hit) returns the same table without recompute.
    out2b = jax.block_until_ready(rope64(t2, seq_len=100, offset=0))
    np.testing.assert_allclose(np.asarray(out2b), ref2, rtol=1e-5, atol=1e-5)

    # Case 3: "awkward" D=96 (lcm packing k=4 -> 384-lane stores), short sequence.
    rope96 = NpuRotaryEmbedding(dim=96, freqs_for="lang", theta=10000)
    t3 = jax.random.uniform(k2, (20,), dtype=jnp.float32, maxval=32.0)
    out3 = jax.block_until_ready(rope96(t3))
    ref3 = npu_rotary_forward_ref(np.asarray(rope96.freqs), np.asarray(t3))
    np.testing.assert_allclose(np.asarray(out3), ref3, rtol=1e-5, atol=1e-5)
    assert out3.shape == (20, 96)

    # Empty-input guard (no pallas_call issued).
    out_empty = rope64(jnp.zeros((0,), jnp.float32))
    assert out_empty.shape == (0, 64)

    print("KERNEL_OK")
</pallas_src>

<mosaic_0001>
module attributes {stable_mosaic.version = 11 : i64} {
  func.func @_rotary_freqs_kernel(%arg0: i32, %arg1: memref<16x4xf32, #tpu.memory_space<vmem>>, %arg2: memref<4x128xf32, #tpu.memory_space<vmem>>, %arg3: memref<16x128xf32, #tpu.memory_space<vmem>>) attributes {dimension_semantics = [#tpu.dimension_semantics<parallel>], iteration_bounds = array<i64: 2>, scalar_prefetch = 0 : i64, scratch_operands = 0 : i64, tpu.core_type = #tpu.core_type<tc>, window_params = [{transform_indices = @transform_0, window_bounds = array<i64: 16, 4>}, {pipeline_mode = #tpu.pipeline_mode<synchronous>, transform_indices = @transform_1, window_bounds = array<i64: 4, 128>}, {transform_indices = @transform_2, window_bounds = array<i64: 16, 128>}]} {
    %c0 = arith.constant 0 : index
    %c0_0 = arith.constant 0 : index
    %0 = vector.load %arg1[%c0, %c0_0] : memref<16x4xf32, #tpu.memory_space<vmem>>, vector<16x4xf32>
    %c0_1 = arith.constant 0 : index
    %c0_2 = arith.constant 0 : index
    %1 = vector.load %arg2[%c0_1, %c0_2] : memref<4x128xf32, #tpu.memory_space<vmem>>, vector<4x128xf32>
    %2 = vector.extract_strided_slice %0 {offsets = [0, 0], sizes = [16, 1], strides = [1, 1]} : vector<16x4xf32> to vector<16x1xf32>
    %3 = vector.extract_strided_slice %1 {offsets = [0, 0], sizes = [1, 128], strides = [1, 1]} : vector<4x128xf32> to vector<1x128xf32>
    %4 = vector.broadcast %2 : vector<16x1xf32> to vector<16x128xf32>
    %5 = vector.broadcast %3 : vector<1x128xf32> to vector<16x128xf32>
    %6 = arith.mulf %4, %5 : vector<16x128xf32>
    %7 = vector.extract_strided_slice %0 {offsets = [0, 1], sizes = [16, 1], strides = [1, 1]} : vector<16x4xf32> to vector<16x1xf32>
    %8 = vector.extract_strided_slice %1 {offsets = [1, 0], sizes = [1, 128], strides = [1, 1]} : vector<4x128xf32> to vector<1x128xf32>
    %9 = vector.broadcast %7 : vector<16x1xf32> to vector<16x128xf32>
    %10 = vector.broadcast %8 : vector<1x128xf32> to vector<16x128xf32>
    %11 = arith.mulf %9, %10 : vector<16x128xf32>
    %12 = arith.addf %6, %11 : vector<16x128xf32>
    %13 = vector.extract_strided_slice %0 {offsets = [0, 2], sizes = [16, 1], strides = [1, 1]} : vector<16x4xf32> to vector<16x1xf32>
    %14 = vector.extract_strided_slice %1 {offsets = [2, 0], sizes = [1, 128], strides = [1, 1]} : vector<4x128xf32> to vector<1x128xf32>
    %15 = vector.broadcast %13 : vector<16x1xf32> to vector<16x128xf32>
    %16 = vector.broadcast %14 : vector<1x128xf32> to vector<16x128xf32>
    %17 = arith.mulf %15, %16 : vector<16x128xf32>
    %18 = arith.addf %12, %17 : vector<16x128xf32>
    %19 = vector.extract_strided_slice %0 {offsets = [0, 3], sizes = [16, 1], strides = [1, 1]} : vector<16x4xf32> to vector<16x1xf32>
    %20 = vector.extract_strided_slice %1 {offsets = [3, 0], sizes = [1, 128], strides = [1, 1]} : vector<4x128xf32> to vector<1x128xf32>
    %21 = vector.broadcast %19 : vector<16x1xf32> to vector<16x128xf32>
    %22 = vector.broadcast %20 : vector<1x128xf32> to vector<16x128xf32>
    %23 = arith.mulf %21, %22 : vector<16x128xf32>
    %24 = arith.addf %18, %23 : vector<16x128xf32>
    %c0_3 = arith.constant 0 : index
    %c0_4 = arith.constant 0 : index
    %25 = vector.load %arg3[%c0_3, %c0_4] : memref<16x128xf32, #tpu.memory_space<vmem>>, vector<16x128xf32>
    tpu.vector_store %arg3[%c0_3, %c0_4], %24 {strides = array<i32>} : memref<16x128xf32, #tpu.memory_space<vmem>>, vector<16x128xf32>,
    return
  }
  func.func @transform_0(%arg0: i32) -> (i32, i32) {
    %c0_i32 = arith.constant 0 : i32
    %c0_i32_0 = arith.constant 0 : i32
    return %arg0, %c0_i32 : i32, i32
  }
  func.func @transform_1(%arg0: i32) -> (i32, i32) {
    %c0_i32 = arith.constant 0 : i32
    %c0_i32_0 = arith.constant 0 : i32
    %c0_i32_1 = arith.constant 0 : i32
    return %c0_i32, %c0_i32_0 : i32, i32
  }
  func.func @transform_2(%arg0: i32) -> (i32, i32) {
    %c0_i32 = arith.constant 0 : i32
    %c0_i32_0 = arith.constant 0 : i32
    return %arg0, %c0_i32 : i32, i32
  }
}

</mosaic_0001>

<llo_original>
// kernel: tpu_custom_call.1
$region0: #{tpu_custom_call.1}
  #allocation0 [shape = 'u32[]', space=smem, size = 0x4, offset = 0x4, fixed_abs, tag = 'smem constant byte address 0x4 - core index']
  #allocation1 [shape = 'u32[72,128]{1,0:T(1,128)}', space=vmem, size = 0x9000, scoped, tag = 'internal scratch']
  %s0 = inlined_call_operand.vmem [shape: f32[32,4], index: 0, kind: input, shape index: {}]
  %s1 = inlined_call_operand.vmem [shape: f32[4,128], index: 1, kind: input, shape index: {}]
  %s2 = inlined_call_operand.hbm [shape: f32[32,128], index: 2, kind: output, shape index: {}]
  %s3 = sld [smem:[#allocation0]]
  $region41: #{tpu_custom_call.1} parent=0
    _
  %s5 = ssub.s32 1, %s3
  %s6 = scalar_select 0, %s5, %s3
  $region1: #{tpu_custom_call.1} parent=0
    #allocation2 [shape = 'u8[16384]{0}', space=vmem, size = 0x4000, scoped, tag = 'output window, operand 0']
    #allocation3 [shape = 's32[2]{0}', space=sflag, size = 0x8, scoped, tag = 'scoped memory for tpu_custom_call.1']
    %7 = vsyncpa [#allocation3], 0
    %s8 = scalar_lea.sflag [#allocation3], 1
    %9 = vsyncpa %s8, 0
    loop: start=0, step=1, limit=4
    $region2: #{tpu_custom_call.1} parent=1 // loop_pre_header
      _
    $region3: #{tpu_custom_call.1} parent=1 // loop_header
      %s11 = sphi 0, %s15
      %p12 = scmp.ge.s32.totalorder %s11, 4
      %s21 = sphi 0, %s23
      %s24 = sphi 0, %s21
      %s25 = sphi 0, %s24
      %s41 = sphi 0, %s25
      %s45 = sphi 0, %s45
      %s47 = sphi 0, %s45
      %s48 = sphi 0, %s47
      %s62 = sphi 0, %s48
      %s68 = sphi 0, %s70
      %s71 = sphi 0, %s68
      %s72 = sphi 0, %s71
      %s88 = sphi 0, %s72
    $region4: #{tpu_custom_call.1} parent=1 // loop_header_branch
      %14 = sbr.rel (%p12) target = $region8
    $region5: #{tpu_custom_call.1} parent=1 // loop_body
      %s16 = ssub.s32 %s11, 1
      %s17 = ssub.s32 %s11, 2
      %s18 = sadd.s32 %s11, 1
      %s19 = ssub.s32 %s11, %s18
      %p20 = scmp.eq.s32.totalorder %s19, 0
      %s22 = sadd.s32 %s21, 1
      %s23 = scalar_select %p20, %s21, %s22
      %p26 = pneg %p20
      %p27 = scmp.eq.s32.totalorder %s11, 1
      %p28 = por %p26, %p27
      %p29 = scmp.ne.s32.totalorder %s21, %s24
      %p30 = scmp.eq.s32.totalorder %s11, 0
      %p31 = por %p29, %p30
      %p32 = scmp.ne.s32.totalorder %s21, %s24
      %p33 = scmp.eq.s32.totalorder %s16, 1
      %p34 = por %p32, %p33
      %p35 = scmp.ne.s32.totalorder %s24, %s25
      %p36 = scmp.eq.s32.totalorder %s16, 0
      %p37 = por %p35, %p36
      %p38 = scmp.ne.s32.totalorder %s24, %s25
      %p39 = scmp.eq.s32.totalorder %s17, 1
      %p40 = por %p38, %p39
      %p42 = scmp.ne.s32.totalorder %s25, %s41
      %p43 = scmp.eq.s32.totalorder %s17, 0
      %p44 = por %p42, %p43
      %s46 = sadd.s32 %s45, 1
      %p49 = scmp.eq.s32.totalorder %s11, 1
      %p50 = scmp.ne.s32.totalorder %s45, %s47
      %p51 = scmp.eq.s32.totalorder %s11, 0
      %p52 = por %p50, %p51
      %p53 = scmp.ne.s32.totalorder %s45, %s47
      %p54 = scmp.eq.s32.totalorder %s16, 1
      %p55 = por %p53, %p54
      %p56 = scmp.ne.s32.totalorder %s47, %s48
      %p57 = scmp.eq.s32.totalorder %s16, 0
      %p58 = por %p56, %p57
      %p59 = scmp.ne.s32.totalorder %s47, %s48
      %p60 = scmp.eq.s32.totalorder %s17, 1
      %p61 = por %p59, %p60
      %p63 = scmp.ne.s32.totalorder %s48, %s62
      %p64 = scmp.eq.s32.totalorder %s17, 0
      %p65 = por %p63, %p64
      %s66 = ssub.s32 %s11, %s18
      %p67 = scmp.eq.s32.totalorder %s66, 0
      %s69 = sadd.s32 %s68, 1
      %s70 = scalar_select %p67, %s68, %s69
      %p73 = pneg %p67
      %p74 = scmp.eq.s32.totalorder %s11, 1
      %p75 = por %p73, %p74
      %p76 = scmp.ne.s32.totalorder %s68, %s71
      %p77 = scmp.eq.s32.totalorder %s11, 0
      %p78 = por %p76, %p77
      %p79 = scmp.ne.s32.totalorder %s68, %s71
      %p80 = scmp.eq.s32.totalorder %s16, 1
      %p81 = por %p79, %p80
      %p82 = scmp.ne.s32.totalorder %s71, %s72
      %p83 = scmp.eq.s32.totalorder %s16, 0
      %p84 = por %p82, %p83
      %p85 = scmp.ne.s32.totalorder %s71, %s72
      %p86 = scmp.eq.s32.totalorder %s17, 1
      %p87 = por %p85, %p86
      %p89 = scmp.ne.s32.totalorder %s72, %s88
      %p90 = scmp.eq.s32.totalorder %s17, 0
      %p91 = por %p89, %p90
      %p92 = scmp.le.s32.totalorder 1, %s11
      %p93 = scmp.lt.s32.totalorder %s11, 3
      %p94 = pnand %p92, %p93
      %p95 = pneg %p94
      // Predicated region
      $region9: #{tpu_custom_call.1} parent=5 // pred_check
        _
      $region10: #{tpu_custom_call.1} parent=5 // pred_check_branch
        %97 = sbr.rel (%p94) target = $region12
      $region11: #{tpu_custom_call.1} parent=5 // pred_region
        %s98 = ssub.s32 %s11, 1
        // Predicated region
        $region13: #{tpu_custom_call.1} parent=11 // pred_check
          %p99 = pneg %p58
        $region14: #{tpu_custom_call.1} parent=11 // pred_check_branch
          %101 = sbr.rel (%p99) target = $region16
        $region15: #{tpu_custom_call.1} parent=11 // pred_region
          _
        $region16: #{tpu_custom_call.1} parent=11 // pred_fallthru
          _
      $region12: #{tpu_custom_call.1} parent=5 // pred_fallthru
        _
      %p102 = scmp.lt.s32.totalorder %s11, 2
      // Predicated region
      $region17: #{tpu_custom_call.1} parent=5 // pred_check
        %p103 = pneg %p102
      $region18: #{tpu_custom_call.1} parent=5 // pred_check_branch
        %105 = sbr.rel (%p103) target = $region20
      $region19: #{tpu_custom_call.1} parent=5 // pred_region
        // Predicated region
        $region21: #{tpu_custom_call.1} parent=19 // pred_check
          %p106 = pneg %p31
        $region22: #{tpu_custom_call.1} parent=19 // pred_check_branch
          %108 = sbr.rel (%p106) target = $region24
        $region23: #{tpu_custom_call.1} parent=19 // pred_region
          %s109 = smul.u32 2, %s11
          %p110 = scmp.lt.s32.totalorder %s109, 3
          %s111 = scalar_select %p110, %s109, 3
          %s112 = smul.addr %s111, 8
          %s113 = scalar_lea.vmem %s0, %s112
          %s114 = smul.u32 2, %s11
        $region24: #{tpu_custom_call.1} parent=19 // pred_fallthru
          _
      $region20: #{tpu_custom_call.1} parent=5 // pred_fallthru
        _
      %p115 = scmp.le.s32.totalorder 1, %s11
      %p116 = scmp.lt.s32.totalorder %s11, 3
      %p117 = pnand %p115, %p116
      %p118 = pneg %p117
      // Predicated region
      $region25: #{tpu_custom_call.1} parent=5 // pred_check
        _
      $region26: #{tpu_custom_call.1} parent=5 // pred_check_branch
        %120 = sbr.rel (%p117) target = $region28
      $region27: #{tpu_custom_call.1} parent=5 // pred_region
        %s121 = ssub.s32 %s11, 1
        %s122 = smul.u32 2, %s16
        %p123 = scmp.lt.s32.totalorder %s122, 3
        %s124 = scalar_select %p123, %s122, 3
        %s125 = smul.addr %s124, 8
        %s126 = scalar_lea.vmem %s0, %s125
        %p127 = pneg %p37
        %p128 = pneg %p34
        %p129 = pneg %p58
        %p130 = pneg %p55
        %p131 = pneg %p84
        %p132 = pneg %p81
        %s133 = sand.u32 %s71, 1
        %s134 = scalar_lea.sflag [#allocation3], %s133
        %s135 = sand.u32 %s71, 1
        %s136 = smul.addr %s135, 16
        %s137 = scalar_lea.vmem [#allocation2], %s136
        %s138 = smul.u32 2, %s16
        %p139 = scmp.lt.s32.totalorder %s138, 3
        %s140 = scalar_select %p139, %s138, 3
        %s141 = smul.addr %s140, 8
        %s142 = scalar_lea.vmem %s0, %s141
        %s143 = smul.u32 2, %s16
        %s144 = smul.u32 2, %s16
        %v145 = vld [vmem:[%s142] sm:$0xff]
        %v146 = vld [vmem:[%s142 + $0x8] sm:$0xff]
        %v147 = vld [vmem:[%s1] sm:$0xf]
        %149 = vset.pattern.permute.xlu0 0
        %150 = vperm.xlu0 %149, %v145
        %v151 = vpop.permute.xlu0 %150
        %154 = vset.pattern.permute.xlu0 0
        %155 = vperm.xlu0 %154, %v146
        %v156 = vpop.permute.xlu0 %155
        %v158 = vperm.slane %v147, 0
        %v159 = vmul.f32 %v151, %v158
        %v160 = vmul.f32 %v156, %v158
        %161 = vset.pattern.permute.xlu0 1
        %162 = vperm.xlu0 %161, %v145
        %v163 = vpop.permute.xlu0 %162
        %165 = vset.pattern.permute.xlu0 1
        %166 = vperm.xlu0 %165, %v146
        %v167 = vpop.permute.xlu0 %166
        %v169 = vperm.slane %v147, 1
        %v170 = vmul.f32 %v163, %v169
        %v171 = vmul.f32 %v167, %v169
        %v172 = vadd.f32 %v159, %v170
        %v173 = vadd.f32 %v160, %v171
        %174 = vset.pattern.permute.xlu0 2
        %175 = vperm.xlu0 %174, %v145
        %v176 = vpop.permute.xlu0 %175
        %178 = vset.pattern.permute.xlu0 2
        %179 = vperm.xlu0 %178, %v146
        %v180 = vpop.permute.xlu0 %179
        %v182 = vperm.slane %v147, 2
        %v183 = vmul.f32 %v176, %v182
        %v184 = vmul.f32 %v180, %v182
        %v185 = vadd.f32 %v172, %v183
        %v186 = vadd.f32 %v173, %v184
        %187 = vset.pattern.permute.xlu0 3
        %188 = vperm.xlu0 %187, %v145
        %v189 = vpop.permute.xlu0 %188
        %191 = vset.pattern.permute.xlu0 3
        %192 = vperm.xlu0 %191, %v146
        %v193 = vpop.permute.xlu0 %192
        %v195 = vperm.slane %v147, 3
        %v196 = vmul.f32 %v189, %v195
        %v197 = vmul.f32 %v193, %v195
        %v198 = vadd.f32 %v185, %v196
        %v199 = vadd.f32 %v186, %v197
        %200 = vst [vmem:[%s137] sm:$0xff] %v198
        %201 = vst [vmem:[%s137 + $0x8] sm:$0xff] %v199
        %s202 = sand.u32 %s71, 1
        %s203 = scalar_lea.sflag [#allocation3], %s202
        %s204 = sand.u32 %s71, 1
        %s205 = smul.addr %s204, 16
        %s206 = scalar_lea.vmem [#allocation2], %s205
        // Predicated region
        $region29: #{tpu_custom_call.1} parent=27 // pred_check
          %p207 = pneg %p81
        $region30: #{tpu_custom_call.1} parent=27 // pred_check_branch
          %209 = sbr.rel (%p207) target = $region32
        $region31: #{tpu_custom_call.1} parent=27 // pred_region
          %s210 = smul.u32 2, %s16
          %212 = vsyncadd %s203, 0
          %s213 = smul.addr %s210, 8
          %s214 = scalar_lea.hbm %s2, %s213
          %s215 = sshll.u32 %s206, 4
          %s216 = int_to_ptr.vmem [resolvable:$true] %s215
          %s217 = sshll.u32 %s214, 4
          %s218 = int_to_ptr.hbm [resolvable:$true] %s217
          %223 = dma.vmem_to_hbm [thread:$0]  %s216, 256, %s218, %s203, 128, 128, 8
        $region32: #{tpu_custom_call.1} parent=27 // pred_fallthru
          _
      $region28: #{tpu_custom_call.1} parent=5 // pred_fallthru
        _
      %p224 = scmp.le.s32.totalorder 2, %s11
      // Predicated region
      $region33: #{tpu_custom_call.1} parent=5 // pred_check
        %p225 = pneg %p224
      $region34: #{tpu_custom_call.1} parent=5 // pred_check_branch
        %227 = sbr.rel (%p225) target = $region36
      $region35: #{tpu_custom_call.1} parent=5 // pred_region
        %s228 = ssub.s32 %s11, 2
        // Predicated region
        $region37: #{tpu_custom_call.1} parent=35 // pred_check
          %p229 = pneg %p87
        $region38: #{tpu_custom_call.1} parent=35 // pred_check_branch
          %231 = sbr.rel (%p229) target = $region40
        $region39: #{tpu_custom_call.1} parent=35 // pred_region
          %s232 = sand.u32 %s72, 1
          %s233 = scalar_lea.sflag [#allocation3], %s232
          %s234 = sand.u32 %s72, 1
          %s235 = smul.addr %s234, 16
          %s236 = scalar_lea.vmem [#allocation2], %s235
          %238 = dma.done %s233, 256
        $region40: #{tpu_custom_call.1} parent=35 // pred_fallthru
          _
      $region36: #{tpu_custom_call.1} parent=5 // pred_fallthru
        _
    $region6: #{tpu_custom_call.1} parent=1 // loop_footer
      %s15 = sadd.s32 1, %s11
    $region7: #{tpu_custom_call.1} parent=1 // loop_footer_branch
      %10 = sbr.rel target = $region3
    $region8: #{tpu_custom_call.1} parent=1 // loop_exit
      _
    %239 = vsyncpa [#allocation3], 1
    %s240 = scalar_lea.sflag [#allocation3], 1
    %241 = vsyncpa %s240, 1

</llo_original>
